<compile_context>
chip_gen: v6e
topology: v6e:2x2x1
jax: 0.10.0
libtpu: 0.0.40
codegen_flags: <defaults>
</compile_context>

<pallas_src>
import jax
import jax.numpy as jnp
from jax.experimental import pallas as pl
from jax.experimental.pallas import tpu as pltpu


def _attention_kernel(enc_ref, hidp_ref, bias_ref, w0e_ref, w1_ref, out_ref):
    bt, s, h = enc_ref.shape
    hp = w0e_ref.shape[1]

    e = enc_ref[...]                                             # (bt, S, H), compute dtype

    # Linear0 on the fused (bt*S, H) rows -> ONE MXU matmul, f32 accumulation.
    # (S is padded to a multiple of 8 in the wrapper so the reshape stays a
    #  cheap re-view of the block layout.)
    pre = jnp.dot(e.reshape(bt * s, h), w0e_ref[...],
                  preferred_element_type=jnp.float32)            # (bt*S, Hp)
    pre = pre.reshape(bt, s, hp) + hidp_ref[...][:, None, :]     # + hidden@W0_hid + b0
    t = jnp.tanh(pre)                                            # f32 (VPU/EUP)
    # TODO(synk): on v6e/v7x the tanh could run in bf16 for ~2x EUP throughput.

    # Linear1 (Hp -> 1): VPU multiply + lane reduction -> lane-major scores.
    # b1 is dropped (constant shift is a no-op under softmax).
    scores = jnp.sum(t * w1_ref[...], axis=-1) + bias_ref[...]   # (bt, S), S on lanes

    # Softmax over S (lane axis) -- max/exp/sum/reciprocal all lane-dense, f32.
    m = jnp.max(scores, axis=-1, keepdims=True)                  # (bt, 1)
    p = jnp.exp(scores - m)                                      # (bt, S)
    denom = jnp.sum(p, axis=-1, keepdims=True)                   # (bt, 1)
    inv = pl.reciprocal(denom, approx=True)                      # EUP seed
    inv = inv * (2.0 - denom * inv)                              # 1 Newton step -> ~f32 exact
    w = p * inv                                                  # (bt, S)

    # Weighted sum of encoder states -> dense (bt, H) output block, f32 acc.
    acc = jnp.sum(w[:, :, None] * e.astype(jnp.float32), axis=1)
    out_ref[...] = acc.astype(out_ref.dtype)


def _pick_block_b(B, S, H, Hp, enc_bytes, vmem_budget_bytes):
    """VMEM-budget- and MXU-aware batch block (multiple of 8, or the full batch)."""
    per_b = (2 * S * H * enc_bytes            # enc block, double-buffered
             + 3 * S * Hp * 4                 # f32 temporaries: pre, tanh, products
             + 2 * (2 * Hp + max(S, 128)) * 4)  # hidp + out + bias blocks, double-buffered
    fixed = H * Hp * enc_bytes + Hp * 4       # single-buffered weight blocks
    vmem_cap = max(1, (vmem_budget_bytes - fixed) // per_b)
    row_target = max(1, pl.cdiv(2048, S))     # ~2K fused rows per Linear0 matmul
    bb = min(B, vmem_cap, row_target)
    if bb >= B:
        return B                              # one block covers the whole batch
    bb = min(bb, max(1, B // 2))              # keep >= 2 grid steps (2 TCs on v7x)
    bb = (bb // 8) * 8                        # sublane-dense 2-D blocks need block_b % 8 == 0
    if bb == 0:
        # TODO(synk): very long S; needs S-chunked online softmax to shrink further.
        bb = min(8, B)
    return bb if bb < B else B


def attention_layer(hidden, enc_seq, mask, params, *,
                    compute_dtype=jnp.bfloat16, block_b=None,
                    vmem_budget_bytes=40 * 1024 * 1024):
    """hidden: (B, 1, H), enc_seq: (B, S, H), mask: (B, S) bool -> (B, H) f32."""
    B, S, H = enc_seq.shape
    w0e, w0h, b0, w1, b1 = params
    del b1  # constant shift on the scores is a no-op under softmax

    # Pad S to a sublane multiple so the in-kernel (bt,S,H)->(bt*S,H) reshape is
    # tile-aligned; padded positions are killed by the additive mask bias.
    Sp = pl.cdiv(S, 8) * 8
    # Lane-pad only the Linear0 OUTPUT columns (weights are small); enc stays unpadded.
    Hp = pl.cdiv(H, 128) * 128
    pad_h = Hp - H

    w0e_p = jnp.pad(w0e, ((0, 0), (0, pad_h))).astype(compute_dtype)      # (H, Hp)
    w0h_p = jnp.pad(w0h, ((0, 0), (0, pad_h))).astype(jnp.float32)        # (H, Hp)
    b0_p = jnp.pad(b0.reshape(1, H), ((0, 0), (0, pad_h))).astype(jnp.float32)
    w1_p = jnp.pad(w1.reshape(1, H), ((0, 0), (0, pad_h))).astype(jnp.float32)

    # Hoisted hidden projection: one batched XLA matmul (constant over S).
    hid_proj = (hidden.reshape(B, H).astype(jnp.float32) @ w0h_p + b0_p)  # (B, Hp)

    # Additive mask bias (finite large-negative; stays f32 even in bf16 mode).
    mask_p = jnp.pad(mask.astype(bool), ((0, 0), (0, Sp - S)), constant_values=False)
    bias = jnp.where(mask_p, 0.0, -1e30).astype(jnp.float32)              # (B, Sp)

    # enc enters the kernel in compute_dtype (bf16 halves the HBM stream; this
    # cast is a no-op if the caller already passes bf16 activations).
    enc_c = enc_seq.astype(compute_dtype)
    if Sp != S:
        enc_c = jnp.pad(enc_c, ((0, 0), (0, Sp - S), (0, 0)))

    enc_bytes = jnp.dtype(compute_dtype).itemsize
    if block_b is None:
        block_b = _pick_block_b(B, Sp, H, Hp, enc_bytes, vmem_budget_bytes)
    block_b = max(1, min(block_b, B))

    num_blocks = pl.cdiv(B, block_b)
    Bp = num_blocks * block_b
    if Bp != B:
        # TODO(synk): handle the ragged batch tail with a partial block instead
        # of materializing a padded copy of enc_seq.
        pad_b = Bp - B
        enc_c = jnp.pad(enc_c, ((0, pad_b), (0, 0), (0, 0)))
        hid_proj = jnp.pad(hid_proj, ((0, pad_b), (0, 0)))
        bias = jnp.pad(bias, ((0, pad_b), (0, 0)))

    grid_spec = pltpu.PrefetchScalarGridSpec(
        num_scalar_prefetch=0,
        grid=(num_blocks,),
        in_specs=[
            pl.BlockSpec((block_b, Sp, H), lambda b: (b, 0, 0)),   # enc (compute_dtype)
            pl.BlockSpec((block_b, Hp), lambda b: (b, 0)),         # hidden@W0_hid + b0 (f32)
            pl.BlockSpec((block_b, Sp), lambda b: (b, 0)),         # additive mask bias (f32)
            pl.BlockSpec((H, Hp), lambda b: (0, 0),
                         pipeline_mode=pl.Buffered(1)),            # W0_enc (constant block)
            pl.BlockSpec((1, Hp), lambda b: (0, 0),
                         pipeline_mode=pl.Buffered(1)),            # W1 row (constant block)
        ],
        out_specs=pl.BlockSpec((block_b, H), lambda b: (b, 0)),
    )

    out = pl.pallas_call(
        _attention_kernel,
        out_shape=jax.ShapeDtypeStruct((Bp, H), jnp.float32),
        grid_spec=grid_spec,
        compiler_params=pltpu.CompilerParams(
            dimension_semantics=("parallel",),
            vmem_limit_bytes=int(vmem_budget_bytes + (8 << 20)),
        ),
    )(enc_c, hid_proj, bias, w0e_p, w1_p)

    return out[:B]   # (B, H); matches torch .squeeze() for B > 1


def _reference(hidden, enc_seq, mask, params):
    """Pure-JAX reference mirroring the PyTorch forward exactly (f32)."""
    w0e, w0h, b0, w1, b1 = params
    B, S, H = enc_seq.shape
    hid_b = jnp.broadcast_to(hidden, (B, S, H))
    pre = jnp.concatenate([enc_seq, hid_b], axis=-1)             # (B, S, 2H)
    w0 = jnp.concatenate([w0e, w0h], axis=0)                     # (2H, H)
    t = jnp.tanh(pre @ w0 + b0)                                  # (B, S, H)
    scores = (t @ w1 + b1)[..., 0]                               # (B, S)
    scores = jnp.where(mask, scores, -jnp.inf)
    w = jax.nn.softmax(scores, axis=-1)                          # (B, S)
    return jnp.einsum("bs,bsh->bh", w, enc_seq)                  # (B, H)


def init_params(key, hid_size):
    """Deterministic synthetic init of linear0 / linear1 parameters."""
    k0, k1, k2, k3 = jax.random.split(key, 4)
    scale0 = 1.0 / jnp.sqrt(2.0 * hid_size)
    scale1 = 1.0 / jnp.sqrt(float(hid_size))
    # linear0: (2H -> H); stored transposed, split into enc / hid halves.
    w0e = jax.random.uniform(k0, (hid_size, hid_size), jnp.float32, -scale0, scale0)
    w0h = jax.random.uniform(k1, (hid_size, hid_size), jnp.float32, -scale0, scale0)
    b0 = jax.random.uniform(k2, (1, hid_size), jnp.float32, -scale0, scale0)
    # linear1: (H -> 1)
    w1 = jax.random.uniform(k3, (hid_size, 1), jnp.float32, -scale1, scale1)
    b1 = jnp.zeros((1, 1), jnp.float32)
    return (w0e, w0h, b0, w1, b1)


def _run_case(case_id, B, S, H, compute_dtype, block_b, tol):
    key = jax.random.fold_in(jax.random.PRNGKey(0), case_id)
    k_enc, k_hid, k_par, k_len = jax.random.split(key, 4)

    enc_seq = jax.random.normal(k_enc, (B, S, H), jnp.float32)
    hidden = jax.random.normal(k_hid, (B, 1, H), jnp.float32)
    lengths = jax.random.randint(k_len, (B,), 1, S + 1)          # >=1 valid pos per row
    mask = jnp.arange(S)[None, :] < lengths[:, None]             # (B, S) bool
    params = init_params(k_par, H)

    out = attention_layer(hidden, enc_seq, mask, params,
                          compute_dtype=compute_dtype, block_b=block_b)
    out = jax.block_until_ready(out)

    ref = _reference(hidden, enc_seq, mask, params)
    assert out.shape == (B, H)
    assert jnp.allclose(out, ref, atol=tol, rtol=tol), (
        case_id, float(jnp.max(jnp.abs(out - ref))))
    return out


if __name__ == "__main__":
    # Case 1: f32 compute, single block (block_b == B), tight tolerance
    # (approx-reciprocal + Newton step keeps the result ~f32 exact).
    _run_case(1, B=2, S=8, H=32, compute_dtype=jnp.float32, block_b=None, tol=1e-4)

    # Case 2: bf16 MXU operands / bf16 enc DMA, 2 grid steps (exercises the
    # multi-block + megacore path); looser tolerance for bf16 rounding.
    _run_case(2, B=16, S=8, H=32, compute_dtype=jnp.bfloat16, block_b=8, tol=5e-2)

    print("KERNEL_OK")
</pallas_src>

<mosaic_0001>
module attributes {stable_mosaic.version = 11 : i64} {
  func.func @_attention_kernel(%arg0: i32, %arg1: memref<2x8x32xf32, #tpu.memory_space<vmem>>, %arg2: memref<2x128xf32, #tpu.memory_space<vmem>>, %arg3: memref<2x8xf32, #tpu.memory_space<vmem>>, %arg4: memref<32x128xf32, #tpu.memory_space<vmem>>, %arg5: memref<1x128xf32, #tpu.memory_space<vmem>>, %arg6: memref<2x32xf32, #tpu.memory_space<vmem>>) attributes {dimension_semantics = [#tpu.dimension_semantics<parallel>], iteration_bounds = array<i64: 1>, scalar_prefetch = 0 : i64, scratch_operands = 0 : i64, tpu.core_type = #tpu.core_type<tc>, window_params = [{transform_indices = @transform_0, window_bounds = array<i64: 2, 8, 32>}, {transform_indices = @transform_1, window_bounds = array<i64: 2, 128>}, {transform_indices = @transform_2, window_bounds = array<i64: 2, 8>}, {pipeline_mode = #tpu.pipeline_mode<synchronous>, transform_indices = @transform_3, window_bounds = array<i64: 32, 128>}, {pipeline_mode = #tpu.pipeline_mode<synchronous>, transform_indices = @transform_4, window_bounds = array<i64: 1, 128>}, {transform_indices = @transform_5, window_bounds = array<i64: 2, 32>}]} {
    %c0 = arith.constant 0 : index
    %c0_0 = arith.constant 0 : index
    %c0_1 = arith.constant 0 : index
    %0 = vector.load %arg1[%c0, %c0_0, %c0_1] : memref<2x8x32xf32, #tpu.memory_space<vmem>>, vector<2x8x32xf32>
    %1 = vector.shape_cast %0 : vector<2x8x32xf32> to vector<16x32xf32>
    %c0_2 = arith.constant 0 : index
    %c0_3 = arith.constant 0 : index
    %2 = vector.load %arg4[%c0_2, %c0_3] : memref<32x128xf32, #tpu.memory_space<vmem>>, vector<32x128xf32>
    %cst = arith.constant dense<0.000000e+00> : vector<16x128xf32>
    %3 = tpu.matmul %1, %2, %cst {dimension_numbers = #tpu.dot_dimension_numbers<[1], [0], [0], [1], [0, 0, 1, 1], [], []>} : vector<16x32xf32>, vector<32x128xf32>, vector<16x128xf32> -> vector<16x128xf32>
    %4 = vector.shape_cast %3 : vector<16x128xf32> to vector<2x8x128xf32>
    %c0_4 = arith.constant 0 : index
    %c0_5 = arith.constant 0 : index
    %5 = vector.load %arg2[%c0_4, %c0_5] : memref<2x128xf32, #tpu.memory_space<vmem>>, vector<2x128xf32>
    %6 = vector.shape_cast %5 : vector<2x128xf32> to vector<2x1x128xf32>
    %7 = vector.broadcast %6 : vector<2x1x128xf32> to vector<2x8x128xf32>
    %8 = arith.addf %4, %7 : vector<2x8x128xf32>
    %9 = math.tanh %8 : vector<2x8x128xf32>
    %c0_6 = arith.constant 0 : index
    %c0_7 = arith.constant 0 : index
    %10 = vector.load %arg5[%c0_6, %c0_7] : memref<1x128xf32, #tpu.memory_space<vmem>>, vector<1x128xf32>
    %11 = vector.shape_cast %10 : vector<1x128xf32> to vector<1x1x128xf32>
    %12 = vector.broadcast %11 : vector<1x1x128xf32> to vector<2x8x128xf32>
    %13 = arith.mulf %9, %12 : vector<2x8x128xf32>
    %cst_8 = arith.constant dense<0.000000e+00> : vector<2x8xf32>
    %14 = vector.multi_reduction <add>, %13, %cst_8 [2] : vector<2x8x128xf32> to vector<2x8xf32>
    %c0_9 = arith.constant 0 : index
    %c0_10 = arith.constant 0 : index
    %15 = vector.load %arg3[%c0_9, %c0_10] : memref<2x8xf32, #tpu.memory_space<vmem>>, vector<2x8xf32>
    %16 = arith.addf %14, %15 : vector<2x8xf32>
    %cst_11 = arith.constant dense<0xFF800000> : vector<2xf32>
    %17 = vector.multi_reduction <maximumf>, %16, %cst_11 [1] : vector<2x8xf32> to vector<2xf32>
    %18 = vector.shape_cast %17 : vector<2xf32> to vector<2x1xf32>
    %19 = vector.broadcast %18 : vector<2x1xf32> to vector<2x8xf32>
    %20 = arith.subf %16, %19 : vector<2x8xf32>
    %21 = math.exp %20 : vector<2x8xf32>
    %cst_12 = arith.constant dense<0.000000e+00> : vector<2xf32>
    %22 = vector.multi_reduction <add>, %21, %cst_12 [1] : vector<2x8xf32> to vector<2xf32>
    %23 = vector.shape_cast %22 : vector<2xf32> to vector<2x1xf32>
    %24 = tpu.reciprocal %23 {approx = true} : vector<2x1xf32> -> vector<2x1xf32>
    %25 = arith.mulf %23, %24 : vector<2x1xf32>
    %cst_13 = arith.constant 2.000000e+00 : f32
    %26 = vector.broadcast %cst_13 : f32 to vector<2x1xf32>
    %27 = arith.subf %26, %25 : vector<2x1xf32>
    %28 = arith.mulf %24, %27 : vector<2x1xf32>
    %29 = vector.broadcast %28 : vector<2x1xf32> to vector<2x8xf32>
    %30 = arith.mulf %21, %29 : vector<2x8xf32>
    %31 = vector.shape_cast %30 : vector<2x8xf32> to vector<2x8x1xf32>
    %32 = vector.broadcast %31 : vector<2x8x1xf32> to vector<2x8x32xf32>
    %33 = arith.mulf %32, %0 : vector<2x8x32xf32>
    %cst_14 = arith.constant dense<0.000000e+00> : vector<2x32xf32>
    %34 = vector.multi_reduction <add>, %33, %cst_14 [1] : vector<2x8x32xf32> to vector<2x32xf32>
    %c0_15 = arith.constant 0 : index
    %c0_16 = arith.constant 0 : index
    %35 = vector.load %arg6[%c0_15, %c0_16] : memref<2x32xf32, #tpu.memory_space<vmem>>, vector<2x32xf32>
    tpu.vector_store %arg6[%c0_15, %c0_16], %34 {strides = array<i32>} : memref<2x32xf32, #tpu.memory_space<vmem>>, vector<2x32xf32>,
    return
  }
  func.func @transform_0(%arg0: i32) -> (i32, i32, i32) {
    %c0_i32 = arith.constant 0 : i32
    %c0_i32_0 = arith.constant 0 : i32
    %c0_i32_1 = arith.constant 0 : i32
    return %arg0, %c0_i32, %c0_i32_0 : i32, i32, i32
  }
  func.func @transform_1(%arg0: i32) -> (i32, i32) {
    %c0_i32 = arith.constant 0 : i32
    %c0_i32_0 = arith.constant 0 : i32
    return %arg0, %c0_i32 : i32, i32
  }
  func.func @transform_2(%arg0: i32) -> (i32, i32) {
    %c0_i32 = arith.constant 0 : i32
    %c0_i32_0 = arith.constant 0 : i32
    return %arg0, %c0_i32 : i32, i32
  }
  func.func @transform_3(%arg0: i32) -> (i32, i32) {
    %c0_i32 = arith.constant 0 : i32
    %c0_i32_0 = arith.constant 0 : i32
    %c0_i32_1 = arith.constant 0 : i32
    return %c0_i32, %c0_i32_0 : i32, i32
  }
  func.func @transform_4(%arg0: i32) -> (i32, i32) {
    %c0_i32 = arith.constant 0 : i32
    %c0_i32_0 = arith.constant 0 : i32
    %c0_i32_1 = arith.constant 0 : i32
    return %c0_i32, %c0_i32_0 : i32, i32
  }
  func.func @transform_5(%arg0: i32) -> (i32, i32) {
    %c0_i32 = arith.constant 0 : i32
    %c0_i32_0 = arith.constant 0 : i32
    return %arg0, %c0_i32 : i32, i32
  }
}

</mosaic_0001>

<llo_original>
// kernel: tpu_custom_call.1
$region0: #{tpu_custom_call.1}
  #allocation0 [shape = 'u32[]', space=smem, size = 0x4, offset = 0x4, fixed_abs, tag = 'smem constant byte address 0x4 - core index']
  #allocation1 [shape = 'u32[144,128]{1,0:T(1,128)}', space=vmem, size = 0x12000, scoped, tag = 'internal scratch']
  %s0 = inlined_call_operand.hbm [shape: f32[2,8,32], index: 0, kind: input, shape index: {}]
  %s1 = inlined_call_operand.hbm [shape: f32[2,128], index: 1, kind: input, shape index: {}]
  %s2 = inlined_call_operand.vmem [shape: f32[2,8], index: 2, kind: input, shape index: {}]
  %s3 = inlined_call_operand.hbm [shape: f32[32,128], index: 3, kind: input, shape index: {}]
  %s4 = inlined_call_operand.vmem [shape: f32[1,128], index: 4, kind: input, shape index: {}]
  %s5 = inlined_call_operand.hbm [shape: f32[2,32], index: 5, kind: output, shape index: {}]
  %s6 = sld [smem:[#allocation0]]
  $region42: #{tpu_custom_call.1} parent=0
    _
  %s8 = ssub.s32 1, %s6
  %s9 = scalar_select 0, %s8, %s6
  $region1: #{tpu_custom_call.1} parent=0
    #allocation2 [shape = 'u8[8192]{0}', space=vmem, size = 0x2000, scoped, tag = 'input window, operand 0, single buffered']
    #allocation3 [shape = 's32[1]{0}', space=sflag, size = 0x4, scoped, tag = 'scoped memory for tpu_custom_call.1']
    #allocation4 [shape = 's32[1]{0}', space=sflag, size = 0x4, scoped, tag = 'scoped memory for tpu_custom_call.1']
    #allocation5 [shape = 'u8[1024]{0}', space=vmem, size = 0x400, scoped, tag = 'input window, operand 1, single buffered']
    #allocation6 [shape = 's32[1]{0}', space=sflag, size = 0x4, scoped, tag = 'scoped memory for tpu_custom_call.1']
    #allocation7 [shape = 'u8[16384]{0}', space=vmem, size = 0x4000, scoped, tag = 'input window, operand 3, single buffered']
    #allocation8 [shape = 'u8[1024]{0}', space=vmem, size = 0x400, scoped, tag = 'output window, operand 0, single buffered']
    %10 = vsyncpa [#allocation3], 0
    %11 = vsyncpa [#allocation6], 0
    %12 = vsyncpa [#allocation4], 0
    // Predicated region
    $region2: #{tpu_custom_call.1} parent=1 // pred_check
      _
    $region3: #{tpu_custom_call.1} parent=1 // pred_check_branch
      %14 = sbr.rel (0) target = $region5
    $region4: #{tpu_custom_call.1} parent=1 // pred_region
      %s16 = ssub.s32 256, 256
      %17 = vsyncadd [#allocation3], %s16
      %s18 = sshll.u32 [#allocation2], 4
      %s19 = int_to_ptr.vmem [resolvable:$true] %s18
      %24 = dma.hbm_to_vmem [thread:$0]  %s0, 256, %s19, [#allocation3], 128, 128, 8
    $region5: #{tpu_custom_call.1} parent=1 // pred_fallthru
      _
    // Predicated region
    $region6: #{tpu_custom_call.1} parent=1 // pred_check
      _
    $region7: #{tpu_custom_call.1} parent=1 // pred_check_branch
      %26 = sbr.rel (0) target = $region9
    $region8: #{tpu_custom_call.1} parent=1 // pred_region
      %s28 = ssub.s32 32, 32
      %29 = vsyncadd [#allocation6], %s28
      %s31 = sshll.u32 [#allocation5], 4
      %s32 = int_to_ptr.vmem [resolvable:$true] %s31
      %34 = dma.hbm_to_vmem [thread:$0]  %s1, 32, %s32, [#allocation6]
    $region9: #{tpu_custom_call.1} parent=1 // pred_fallthru
      _
    // Predicated region
    $region10: #{tpu_custom_call.1} parent=1 // pred_check
      _
    $region11: #{tpu_custom_call.1} parent=1 // pred_check_branch
      %36 = sbr.rel (0) target = $region13
    $region12: #{tpu_custom_call.1} parent=1 // pred_region
      _
    $region13: #{tpu_custom_call.1} parent=1 // pred_fallthru
      _
    // Predicated region
    $region14: #{tpu_custom_call.1} parent=1 // pred_check
      _
    $region15: #{tpu_custom_call.1} parent=1 // pred_check_branch
      %38 = sbr.rel (0) target = $region17
    $region16: #{tpu_custom_call.1} parent=1 // pred_region
      %s40 = ssub.s32 512, 512
      %41 = vsyncadd [#allocation6], %s40
      %s42 = sshll.u32 [#allocation7], 4
      %s43 = int_to_ptr.vmem [resolvable:$true] %s42
      %48 = dma.hbm_to_vmem [thread:$0]  %s3, 512, %s43, [#allocation6], 128, 128, 8
    $region17: #{tpu_custom_call.1} parent=1 // pred_fallthru
      _
    // Predicated region
    $region18: #{tpu_custom_call.1} parent=1 // pred_check
      _
    $region19: #{tpu_custom_call.1} parent=1 // pred_check_branch
      %50 = sbr.rel (0) target = $region21
    $region20: #{tpu_custom_call.1} parent=1 // pred_region
      _
    $region21: #{tpu_custom_call.1} parent=1 // pred_fallthru
      _
    // Predicated region
    $region22: #{tpu_custom_call.1} parent=1 // pred_check
      _
    $region23: #{tpu_custom_call.1} parent=1 // pred_check_branch
      %52 = sbr.rel (0) target = $region25
    $region24: #{tpu_custom_call.1} parent=1 // pred_region
      %53 = dma.done [#allocation3], 256
    $region25: #{tpu_custom_call.1} parent=1 // pred_fallthru
      _
    // Predicated region
    $region26: #{tpu_custom_call.1} parent=1 // pred_check
      _
    $region27: #{tpu_custom_call.1} parent=1 // pred_check_branch
      %55 = sbr.rel (0) target = $region29
    $region28: #{tpu_custom_call.1} parent=1 // pred_region
      %56 = dma.done [#allocation6], 32
    $region29: #{tpu_custom_call.1} parent=1 // pred_fallthru
      _
    // Predicated region
    $region30: #{tpu_custom_call.1} parent=1 // pred_check
      _
    $region31: #{tpu_custom_call.1} parent=1 // pred_check_branch
      %58 = sbr.rel (0) target = $region33
    $region32: #{tpu_custom_call.1} parent=1 // pred_region
      %59 = dma.done [#allocation6], 512
    $region33: #{tpu_custom_call.1} parent=1 // pred_fallthru
      _
    %v60 = vld [vmem:[#allocation2] sm:$0xff]
    %v61 = vld [vmem:[#allocation2 + $0x8] sm:$0xff]
    %v62 = vld [vmem:[#allocation7] sm:$0xff]
    %v63 = vld [vmem:[#allocation7 + $0x8] sm:$0xff]
    %v64 = vld [vmem:[#allocation7 + $0x10] sm:$0xff]
    %v65 = vld [vmem:[#allocation7 + $0x18] sm:$0xff]
    %vm66 = vcmask 261120
    %v68 = vsel %vm66, %v60, 0
    %v71 = vsel %vm66, %v61, 0
    %73 = vmatprep.subr.mxu0 0.0
    %74 = vmatpush1.msra.mxu0 0.0
    %75 = vmatprep.subr.mxu0 0.0
    %76 = vmatpush1.msra.mxu0 0.0
    %77 = vmatprep.subr.mxu0 0.0
    %78 = vmatpush1.msra.mxu0 0.0
    %79 = vmatprep.subr.mxu0 0.0
    %80 = vmatpush1.msra.mxu0 0.0
    %81 = vmatprep.subr.mxu0 0.0
    %82 = vmatpush1.msra.mxu0 0.0
    %83 = vmatprep.subr.mxu0 0.0
    %84 = vmatpush1.msra.mxu0 0.0
    %85 = vmatprep.subr.mxu0 0.0
    %86 = vmatpush1.msra.mxu0 0.0
    %87 = vmatprep.subr.mxu0 0.0
    %88 = vmatpush1.msra.mxu0 0.0
    %89 = vmatprep.subr.mxu0 0.0
    %90 = vmatpush1.msra.mxu0 0.0
    %91 = vmatprep.subr.mxu0 0.0
    %92 = vmatpush1.msra.mxu0 0.0
    %93 = vmatprep.subr.mxu0 0.0
    %94 = vmatpush1.msra.mxu0 0.0
    %95 = vmatprep.subr.mxu0 0.0
    %96 = vmatpush1.msra.mxu0 0.0
    %97 = vmatprep.subr.mxu0 0.0
    %98 = vmatpush1.msra.mxu0 %v65
    %99 = vmatprep.subr.mxu0 0.0
    %100 = vmatpush1.msra.mxu0 %v64
    %101 = vmatprep.subr.mxu0 0.0
    %102 = vmatpush1.msra.mxu0 %v63
    %103 = vmatprep.subr.mxu0 0.0
    %104 = vmatpush1.msra.mxu0 %v62
    %105 = vmatprep.subr.mxu0 0.0
    %106 = vmatpush2.msra.mxu0 0.0
    %107 = vmatprep.subr.mxu0 0.0
    %108 = vmatpush2.msra.mxu0 0.0
    %109 = vmatprep.subr.mxu0 0.0
    %110 = vmatpush2.msra.mxu0 0.0
    %111 = vmatprep.subr.mxu0 0.0
    %112 = vmatpush2.msra.mxu0 0.0
    %113 = vmatprep.subr.mxu0 0.0
    %114 = vmatpush2.msra.mxu0 0.0
    %115 = vmatprep.subr.mxu0 0.0
    %116 = vmatpush2.msra.mxu0 0.0
    %117 = vmatprep.subr.mxu0 0.0
    %118 = vmatpush2.msra.mxu0 0.0
    %119 = vmatprep.subr.mxu0 0.0
    %120 = vmatpush2.msra.mxu0 0.0
    %121 = vmatprep.subr.mxu0 0.0
    %122 = vmatpush2.msra.mxu0 0.0
    %123 = vmatprep.subr.mxu0 0.0
    %124 = vmatpush2.msra.mxu0 0.0
    %125 = vmatprep.subr.mxu0 0.0
    %126 = vmatpush2.msra.mxu0 0.0
    %127 = vmatprep.subr.mxu0 0.0
    %128 = vmatpush2.msra.mxu0 0.0
    %129 = vmatprep.subr.mxu0 0.0
    %130 = vmatpush2.msra.mxu0 0.0
    %131 = vmatprep.subr.mxu0 0.0
    %132 = vmatpush2.msra.mxu0 0.0
    %133 = vmatprep.subr.mxu0 0.0
    %134 = vmatpush2.msra.mxu0 0.0
    %135 = vmatprep.subr.mxu0 0.0
    %136 = vmatpush2.msra.mxu0 0.0
    %137 = vmatprep.mubr.f32.mxu0 0.0
    %138 = vmatmul.mubr.f32.gmra.mxu0 %v68
    %v139 = vpop.f32.mrf.mxu0
    %v140 = vadd.f32 0.0, %v139
    %v141 = vpop.f32.mrf.mxu0
    %142 = vmatprep.mubr.f32.mxu0 0.0
    %143 = vmatmul.mubr.f32.gmra.mxu0 %v71
    %v144 = vpop.f32.mrf.mxu0
    %v145 = vadd.f32 0.0, %v144
    %v146 = vpop.f32.mrf.mxu0
    %147 = vdwg.mxu0
    %v148 = vld [vmem:[#allocation5] sm:$0x3]
    %v151 = vunpack.c.l.s4 1966171168
    %v152 = vunpack.c.0.s8 %v151
    %v153 = vlaneseq
    %v154 = vshrl.u32 %v153, 7
    %v155 = vsub.s32 %v152, %v154
    %v156 = vrot.slane %v148, %v155
    %v157 = vcombine.high %v156, %v156
    %v159 = vunpack.c.l.s4 1966171168
    %v160 = vunpack.c.0.s8 %v159
    %v161 = vlaneseq
    %v162 = vshrl.u32 %v161, 7
    %v163 = vsub.s32 %v160, %v162
    %v164 = vrot.slane %v156, %v163
    %v166 = vunpack.c.l.s4 1966171168
    %v167 = vunpack.c.0.s8 %v166
    %v168 = vlaneseq
    %v169 = vshrl.u32 %v168, 7
    %v170 = vsub.s32 %v167, %v169
    %v171 = vrot.slane %v157, %v170
    %v172 = vlaneseq
    %v173 = vshrl.u32 %v172, 7
    %v174 = vsub.s32 0, %v173
    %v175 = vrot.slane %v164, %v174
    %v176 = vlaneseq
    %v177 = vshrl.u32 %v176, 7
    %v178 = vsub.s32 0, %v177
    %v179 = vrot.slane %v171, %v178
    %v182 = vadd.f32 %v140, %v175
    %v183 = vadd.f32 %v145, %v179
    %v184 = vtanh.pop %v182
    %v185 = vtanh.pop %v183
    %v186 = vld [vmem:[%s4] sm:$0x1]
    %v188 = vlaneseq
    %v189 = vshrl.u32 %v188, 7
    %v190 = vsub.s32 0, %v189
    %v191 = vrot.slane %v186, %v190
    %v193 = vmul.f32 %v184, %v191
    %v194 = vmul.f32 %v185, %v191
    %195 = vadd.xlane.f32.xlu0 %v193
    %v196 = vpop.xlane.xlu0 %195
    %197 = vadd.xlane.f32.xlu0 %v194
    %v198 = vpop.xlane.xlu0 %197
    %v199 = vld [vmem:[%s2] sm:$0x3]
    %v201 = vlaneseq
    %v202 = vshrl.u32 %v201, 7
    %v203 = vsub.s32 0, %v202
    %v204 = vrot.slane %v199, %v203
    %206 = vbcast.lane.b32.xlu0 %v204, 256
    %v207 = vpop.permute.xlu0 %206
    %v208 = vlaneseq
    %v209 = vshrl.u32 %v208, 7
    %v210 = vsub.s32 1, %v209
    %v211 = vrot.slane %v199, %v210
    %213 = vbcast.lane.b32.xlu0 %v211, 256
    %v214 = vpop.permute.xlu0 %213
    %v217 = vadd.f32 %v196, %v207
    %v218 = vadd.f32 %v198, %v214
    %221 = vset.pattern.permute.xlu0 0
    %222 = vperm.xlu0 %221, %v217
    %v223 = vpop.permute.xlu0 %222
    %224 = vset.pattern.permute.xlu0 0
    %225 = vperm.xlu0 %224, %v218
    %v226 = vpop.permute.xlu0 %225
    %v227 = vlaneseq
    %v228 = vand.u32 %v227, 127
    %v229 = vlaneseq
    %v230 = vshrl.u32 %v229, 7
    %v231 = vsub.s32 %v228, %v230
    %v232 = vrot.slane %v223, %v231
    %v233 = vlaneseq
    %v234 = vshrl.u32 %v233, 7
    %v235 = vsub.s32 %v228, %v234
    %v236 = vrot.slane %v226, %v235
    %vm237 = vcmask 1041409
    %v238 = vsel %vm237, %v236, %v232
    %vm240 = vcmask 58368
    %v241 = vsel %vm240, %v238, -inf
    %242 = vmax.xlane.f32.xlu0 %v241
    %v243 = vpop.xlane.xlu0 %242
    %v245 = vlaneseq
    %v246 = vshrl.u32 %v245, 7
    %v247 = vsub.s32 0, %v246
    %v248 = vrot.slane %v243, %v247
    %v249 = vlaneseq
    %v250 = vshrl.u32 %v249, 7
    %v251 = vsub.s32 1, %v250
    %v252 = vrot.slane %v243, %v251
    %v255 = vsub.f32 %v217, %v248
    %v256 = vsub.f32 %v218, %v252
    %v257 = vmul.f32 %v255, 1.442695
    %v258 = vpow.pop %v257
    %v259 = vmul.f32 %v256, 1.442695
    %v260 = vpow.pop %v259
    %263 = vset.pattern.permute.xlu0 0
    %264 = vperm.xlu0 %263, %v258
    %v265 = vpop.permute.xlu0 %264
    %266 = vset.pattern.permute.xlu0 0
    %267 = vperm.xlu0 %266, %v260
    %v268 = vpop.permute.xlu0 %267
    %v269 = vlaneseq
    %v270 = vshrl.u32 %v269, 7
    %v271 = vsub.s32 %v228, %v270
    %v272 = vrot.slane %v265, %v271
    %v273 = vlaneseq
    %v274 = vshrl.u32 %v273, 7
    %v275 = vsub.s32 %v228, %v274
    %v276 = vrot.slane %v268, %v275
    %v277 = vsel %vm237, %v276, %v272
    %v279 = vsel %vm240, %v277, 0.0
    %280 = vadd.xlane.f32.xlu0 %v279
    %v281 = vpop.xlane.xlu0 %280
    %v282 = vrcp.pop %v281
    %v283 = vmul.f32 %v281, %v282
    %v284 = vsub.f32 2.0, %v283
    %v285 = vmul.f32 %v282, %v284
    %v287 = vlaneseq
    %v288 = vshrl.u32 %v287, 7
    %v289 = vsub.s32 0, %v288
    %v290 = vrot.slane %v285, %v289
    %v291 = vlaneseq
    %v292 = vshrl.u32 %v291, 7
    %v293 = vsub.s32 1, %v292
    %v294 = vrot.slane %v285, %v293
    %v297 = vmul.f32 %v258, %v290
    %v298 = vmul.f32 %v260, %v294
    %300 = vset.pattern.permute.xlu0 0
    %301 = vperm.xlu0 %300, %v297
    %v302 = vpop.permute.xlu0 %301
    %305 = vset.pattern.permute.xlu0 0
    %306 = vperm.xlu0 %305, %v298
    %v307 = vpop.permute.xlu0 %306
    %v309 = vmul.f32 %v302, %v60
    %v310 = vmul.f32 %v307, %v61
    %v311 = vsel %vm66, %v309, 0.0
    %v312 = vrot.slane %v311, 4
    %v313 = vadd.f32 %v311, %v312
    %v314 = vrot.slane %v313, 2
    %v315 = vadd.f32 %v313, %v314
    %v316 = vrot.slane %v315, 1
    %v317 = vadd.f32 %v315, %v316
    %v318 = vsel %vm66, %v310, 0.0
    %v319 = vrot.slane %v318, 4
    %v320 = vadd.f32 %v318, %v319
    %v321 = vrot.slane %v320, 2
    %v322 = vadd.f32 %v320, %v321
    %v323 = vrot.slane %v322, 1
    %v324 = vadd.f32 %v322, %v323
    %v327 = vsel %vm237, %v324, %v317
    %vm329 = vcmask 254976
    %330 = vst.msk [vmem:[#allocation8] sm:$0x3] %vm329, %v327
    // Predicated region
    $region34: #{tpu_custom_call.1} parent=1 // pred_check
      _
    $region35: #{tpu_custom_call.1} parent=1 // pred_check_branch
      %332 = sbr.rel (0) target = $region37
    $region36: #{tpu_custom_call.1} parent=1 // pred_region
      %s334 = ssub.s32 32, 32
      %335 = vsyncadd [#allocation4], %s334
      %s337 = sshll.u32 [#allocation8], 4
      %s338 = int_to_ptr.vmem [resolvable:$true] %s337
      %340 = dma.vmem_to_hbm [thread:$0]  %s338, 32, %s5, [#allocation4]
    $region37: #{tpu_custom_call.1} parent=1 // pred_fallthru
      _
    // Predicated region
    $region38: #{tpu_custom_call.1} parent=1 // pred_check
      _
    $region39: #{tpu_custom_call.1} parent=1 // pred_check_branch
      %342 = sbr.rel (0) target = $region41
    $region40: #{tpu_custom_call.1} parent=1 // pred_region
      %343 = dma.done [#allocation4], 32
    $region41: #{tpu_custom_call.1} parent=1 // pred_fallthru
      _
    %344 = vsyncpa [#allocation3], 1
    %345 = vsyncpa [#allocation6], 1
    %346 = vsyncpa [#allocation4], 1

</llo_original>
